<compile_context>
chip_gen: v7x
topology: tpu7x:2x2x1
jax: 0.10.0
libtpu: 0.0.40
codegen_flags: <defaults>
</compile_context>

<pallas_src>
import jax
import jax.numpy as jnp
from jax.experimental import pallas as pl
from jax.experimental.pallas import tpu as pltpu

_LANES = 128                    # vreg lane width (fast axis)
_SUBLANES = 8                   # f32 vreg sublane height
_ALIGN = _LANES * _SUBLANES     # 1024 elements -> rows multiple of 8
_MAX_BLOCK_ROWS = 4096          # 4096*128*4B = 2 MiB / block (8 MiB dbl-buffered)
_SMALL_BATCH = 1 << 14          # below this, plain XLA FMA beats a kernel launch


def _round_up(v, m):
    return ((v + m - 1) // m) * m


def _lr_kernel(wb_ref, x_ref, o_ref):
    # wb_ref: SMEM (2,) f32 scalar-prefetch buffer holding [weight, bias].
    # x_ref / o_ref: lane-dense (block_rows, 128) VMEM tiles.
    w = wb_ref[0]
    b = wb_ref[1]
    # Compute in f32, cast only on the store (keeps parity with torch f32 Linear).
    o_ref[...] = (x_ref[...].astype(jnp.float32) * w + b).astype(o_ref.dtype)


def _lr_slab(slab, wb):
    """Run y = x*w + b over a lane-dense (rows, 128) slab."""
    rows, lanes = slab.shape
    if rows <= 2 * _SUBLANES:
        block_rows = rows                       # single full-extent block
    else:
        # Keep >= 2 grid steps (v7x megacore) while capping the block at 2 MiB.
        block_rows = min(_MAX_BLOCK_ROWS, _round_up(pl.cdiv(rows, 2), _SUBLANES))
    n_tiles = pl.cdiv(rows, block_rows)         # last block may be partial (masked)
    n_elems = rows * lanes

    return pl.pallas_call(
        _lr_kernel,
        out_shape=jax.ShapeDtypeStruct((rows, lanes), slab.dtype),
        grid_spec=pltpu.PrefetchScalarGridSpec(
            num_scalar_prefetch=1,
            grid=(n_tiles,),
            in_specs=[pl.BlockSpec((block_rows, lanes), lambda i, wb: (i, 0))],
            out_specs=pl.BlockSpec((block_rows, lanes), lambda i, wb: (i, 0)),
        ),
        compiler_params=pltpu.CompilerParams(
            dimension_semantics=("parallel",),
        ),
        cost_estimate=pl.CostEstimate(
            flops=2 * n_elems,
            bytes_accessed=2 * n_elems * slab.dtype.itemsize,
            transcendentals=0,
        ),
    )(wb, slab)


def lr_forward(x, weight, bias):
    """x: (B, 1), weight: (1, 1) f32, bias: (1,) f32 -> (B, 1)."""
    B, in_f = x.shape
    assert in_f == 1 and weight.shape == (1, 1) and bias.shape == (1,)

    w = weight.astype(jnp.float32).reshape(())
    b = bias.astype(jnp.float32).reshape(())

    # Small-batch fast path: let XLA fuse the FMA; a pallas launch is pure overhead.
    if B < _SMALL_BATCH:
        return (x.astype(jnp.float32) * w + b).astype(x.dtype)

    wb = jnp.stack([w, b])  # (2,) f32 -> SMEM via scalar prefetch

    if B % _LANES == 0:
        # No-copy path: pure reshape into a lane-dense slab and back.
        rows = B // _LANES
        out = _lr_slab(x.reshape(rows, _LANES), wb)
        return out.reshape(B, 1)

    # Ragged large batch: kernel on the 1024-aligned prefix, XLA FMA on the
    # (< 1024-element) tail.
    # TODO(synk): a memory_space=pl.ANY + manual-DMA kernel could also absorb the
    # tail and avoid the prefix-slice / concat copies entirely.
    B_main = (B // _ALIGN) * _ALIGN
    flat = x.reshape(-1)
    main = _lr_slab(flat[:B_main].reshape(B_main // _LANES, _LANES), wb).reshape(-1)
    tail = (flat[B_main:].astype(jnp.float32) * w + b).astype(x.dtype)
    return jnp.concatenate([main, tail]).reshape(B, 1)


if __name__ == "__main__":
    key = jax.random.PRNGKey(0)
    kx, kw, kb, kx2, kx3 = jax.random.split(key, 5)

    # Deterministic params (PyTorch Linear(1,1) init range for fan_in=1 is U(-1,1)).
    weight = jax.random.uniform(kw, (1, 1), minval=-1.0, maxval=1.0, dtype=jnp.float32)
    bias = jax.random.uniform(kb, (1,), minval=-1.0, maxval=1.0, dtype=jnp.float32)

    def ref(v):
        return v @ weight.T + bias

    # Spec-sized case (batch=8, in_features=1) -> small-batch XLA fast path.
    x = jax.random.normal(kx, (8, 1), dtype=jnp.float32)
    out = jax.block_until_ready(lr_forward(x, weight, bias))
    assert out.shape == (8, 1)
    assert jnp.allclose(out, ref(x), atol=1e-6)

    # Lane-aligned large batch -> no-copy reshape + Pallas kernel (2 grid steps).
    x2 = jax.random.normal(kx2, (16384, 1), dtype=jnp.float32)
    out2 = jax.block_until_ready(lr_forward(x2, weight, bias))
    assert out2.shape == (16384, 1)
    assert jnp.allclose(out2, ref(x2), atol=1e-6)

    # Ragged large batch -> kernel on aligned prefix + XLA tail.
    x3 = jax.random.normal(kx3, (20037, 1), dtype=jnp.float32)
    out3 = jax.block_until_ready(lr_forward(x3, weight, bias))
    assert out3.shape == (20037, 1)
    assert jnp.allclose(out3, ref(x3), atol=1e-6)

    print("KERNEL_OK")
</pallas_src>

<mosaic_0001>
module attributes {stable_mosaic.version = 11 : i64} {
  func.func @_lr_kernel(%arg0: i32, %arg1: memref<2xf32, #tpu.memory_space<smem>>, %arg2: memref<64x128xf32, #tpu.memory_space<vmem>>, %arg3: memref<64x128xf32, #tpu.memory_space<vmem>>) attributes {dimension_semantics = [#tpu.dimension_semantics<parallel>], iteration_bounds = array<i64: 2>, scalar_prefetch = 1 : i64, scratch_operands = 0 : i64, tpu.core_type = #tpu.core_type<tc>, window_params = [{transform_indices = @transform_0, window_bounds = array<i64: 64, 128>}, {transform_indices = @transform_1, window_bounds = array<i64: 64, 128>}]} {
    %c0 = arith.constant 0 : index
    %0 = memref.load %arg1[%c0] : memref<2xf32, #tpu.memory_space<smem>>
    %c1 = arith.constant 1 : index
    %1 = memref.load %arg1[%c1] : memref<2xf32, #tpu.memory_space<smem>>
    %c0_0 = arith.constant 0 : index
    %c0_1 = arith.constant 0 : index
    %2 = vector.load %arg2[%c0_0, %c0_1] : memref<64x128xf32, #tpu.memory_space<vmem>>, vector<64x128xf32>
    %3 = vector.broadcast %0 : f32 to vector<64x128xf32>
    %4 = arith.mulf %2, %3 : vector<64x128xf32>
    %5 = vector.broadcast %1 : f32 to vector<64x128xf32>
    %6 = arith.addf %4, %5 : vector<64x128xf32>
    %c0_2 = arith.constant 0 : index
    %c0_3 = arith.constant 0 : index
    %7 = vector.load %arg3[%c0_2, %c0_3] : memref<64x128xf32, #tpu.memory_space<vmem>>, vector<64x128xf32>
    tpu.vector_store %arg3[%c0_2, %c0_3], %6 {strides = array<i32>} : memref<64x128xf32, #tpu.memory_space<vmem>>, vector<64x128xf32>,
    return
  }
  func.func @transform_0(%arg0: i32, %arg1: memref<2xf32, #tpu.memory_space<smem>>) -> (i32, i32) {
    %c0_i32 = arith.constant 0 : i32
    %c0_i32_0 = arith.constant 0 : i32
    return %arg0, %c0_i32 : i32, i32
  }
  func.func @transform_1(%arg0: i32, %arg1: memref<2xf32, #tpu.memory_space<smem>>) -> (i32, i32) {
    %c0_i32 = arith.constant 0 : i32
    %c0_i32_0 = arith.constant 0 : i32
    return %arg0, %c0_i32 : i32, i32
  }
}

</mosaic_0001>

<llo_original>
// kernel: tpu_custom_call.1
$region0: #{tpu_custom_call.1}
  #allocation0 [shape = 'u32[]', space=smem, size = 0x4, offset = 0x4, fixed_abs, tag = 'smem constant byte address 0x4 - core index']
  #allocation1 [shape = 'u32[144,128]{1,0:T(1,128)}', space=vmem, size = 0x12000, scoped, tag = 'internal scratch']
  #allocation2 [shape = 's32[1]{0}', space=sflag, size = 0x4, scoped, tag = 'scoped memory for tpu_custom_call.1']
  #allocation3 [shape = 'u8[512]{0}', space=smem, size = 0x200, scoped, tag = 'prefetched SMEM operand 0']
  %s0 = inlined_call_operand.hbm [shape: f32[2], index: 0, kind: input, shape index: {}]
  %s1 = inlined_call_operand.hbm [shape: f32[128,128], index: 1, kind: input, shape index: {}]
  %s2 = inlined_call_operand.hbm [shape: f32[128,128], index: 2, kind: output, shape index: {}]
  %s3 = sld [smem:[#allocation0]]
  $region41: #{tpu_custom_call.1} parent=0
    _
  %s5 = ssub.s32 1, %s3
  %s6 = scalar_select 0, %s5, %s3
  %8 = dma.hbm_to_smem %s0, 16, [#allocation3], [#allocation2]
  %9 = dma.done [#allocation2], 16
  %10 = sfence
  $region1: #{tpu_custom_call.1} parent=0
    #allocation4 [shape = 'u8[65536]{0}', space=vmem, size = 0x10000, scoped, tag = 'input window, operand 1']
    #allocation5 [shape = 's32[2]{0}', space=sflag, size = 0x8, scoped, tag = 'scoped memory for tpu_custom_call.1']
    #allocation6 [shape = 's32[2]{0}', space=sflag, size = 0x8, scoped, tag = 'scoped memory for tpu_custom_call.1']
    #allocation7 [shape = 'u8[65536]{0}', space=vmem, size = 0x10000, scoped, tag = 'output window, operand 0']
    %11 = vsyncpa [#allocation5], 0
    %s12 = scalar_lea.sflag [#allocation5], 1
    %13 = vsyncpa %s12, 0
    %14 = vsyncpa [#allocation6], 0
    %s15 = scalar_lea.sflag [#allocation6], 1
    %16 = vsyncpa %s15, 0
    loop: start=0, step=1, limit=4
    $region2: #{tpu_custom_call.1} parent=1 // loop_pre_header
      _
    $region3: #{tpu_custom_call.1} parent=1 // loop_header
      %s18 = sphi 0, %s22
      %p19 = scmp.ge.s32.totalorder %s18, 4
      %s28 = sphi 0, %s30
      %s31 = sphi 0, %s28
      %s32 = sphi 0, %s31
      %s48 = sphi 0, %s32
      %s54 = sphi 0, %s56
      %s57 = sphi 0, %s54
      %s58 = sphi 0, %s57
      %s74 = sphi 0, %s58
    $region4: #{tpu_custom_call.1} parent=1 // loop_header_branch
      %21 = sbr.rel (%p19) target = $region8
    $region5: #{tpu_custom_call.1} parent=1 // loop_body
      %s23 = ssub.s32 %s18, 1
      %s24 = ssub.s32 %s18, 2
      %s25 = sadd.s32 %s18, 1
      %s26 = ssub.s32 %s18, %s25
      %p27 = scmp.eq.s32.totalorder %s26, 0
      %s29 = sadd.s32 %s28, 1
      %s30 = scalar_select %p27, %s28, %s29
      %p33 = pneg %p27
      %p34 = scmp.eq.s32.totalorder %s18, 1
      %p35 = por %p33, %p34
      %p36 = scmp.ne.s32.totalorder %s28, %s31
      %p37 = scmp.eq.s32.totalorder %s18, 0
      %p38 = por %p36, %p37
      %p39 = scmp.ne.s32.totalorder %s28, %s31
      %p40 = scmp.eq.s32.totalorder %s23, 1
      %p41 = por %p39, %p40
      %p42 = scmp.ne.s32.totalorder %s31, %s32
      %p43 = scmp.eq.s32.totalorder %s23, 0
      %p44 = por %p42, %p43
      %p45 = scmp.ne.s32.totalorder %s31, %s32
      %p46 = scmp.eq.s32.totalorder %s24, 1
      %p47 = por %p45, %p46
      %p49 = scmp.ne.s32.totalorder %s32, %s48
      %p50 = scmp.eq.s32.totalorder %s24, 0
      %p51 = por %p49, %p50
      %s52 = ssub.s32 %s18, %s25
      %p53 = scmp.eq.s32.totalorder %s52, 0
      %s55 = sadd.s32 %s54, 1
      %s56 = scalar_select %p53, %s54, %s55
      %p59 = pneg %p53
      %p60 = scmp.eq.s32.totalorder %s18, 1
      %p61 = por %p59, %p60
      %p62 = scmp.ne.s32.totalorder %s54, %s57
      %p63 = scmp.eq.s32.totalorder %s18, 0
      %p64 = por %p62, %p63
      %p65 = scmp.ne.s32.totalorder %s54, %s57
      %p66 = scmp.eq.s32.totalorder %s23, 1
      %p67 = por %p65, %p66
      %p68 = scmp.ne.s32.totalorder %s57, %s58
      %p69 = scmp.eq.s32.totalorder %s23, 0
      %p70 = por %p68, %p69
      %p71 = scmp.ne.s32.totalorder %s57, %s58
      %p72 = scmp.eq.s32.totalorder %s24, 1
      %p73 = por %p71, %p72
      %p75 = scmp.ne.s32.totalorder %s58, %s74
      %p76 = scmp.eq.s32.totalorder %s24, 0
      %p77 = por %p75, %p76
      %p78 = scmp.le.s32.totalorder 1, %s18
      %p79 = scmp.lt.s32.totalorder %s18, 3
      %p80 = pnand %p78, %p79
      %p81 = pneg %p80
      // Predicated region
      $region9: #{tpu_custom_call.1} parent=5 // pred_check
        _
      $region10: #{tpu_custom_call.1} parent=5 // pred_check_branch
        %83 = sbr.rel (%p80) target = $region12
      $region11: #{tpu_custom_call.1} parent=5 // pred_region
        %s84 = ssub.s32 %s18, 1
      $region12: #{tpu_custom_call.1} parent=5 // pred_fallthru
        _
      %p85 = scmp.lt.s32.totalorder %s18, 2
      // Predicated region
      $region13: #{tpu_custom_call.1} parent=5 // pred_check
        %p86 = pneg %p85
      $region14: #{tpu_custom_call.1} parent=5 // pred_check_branch
        %88 = sbr.rel (%p86) target = $region16
      $region15: #{tpu_custom_call.1} parent=5 // pred_region
        // Predicated region
        $region17: #{tpu_custom_call.1} parent=15 // pred_check
          %p89 = pneg %p38
        $region18: #{tpu_custom_call.1} parent=15 // pred_check_branch
          %91 = sbr.rel (%p89) target = $region20
        $region19: #{tpu_custom_call.1} parent=15 // pred_region
          %s92 = sand.u32 %s28, 1
          %s93 = scalar_lea.sflag [#allocation5], %s92
          %s94 = sand.u32 %s28, 1
          %s95 = smul.addr %s94, 64
          %s96 = scalar_lea.vmem [#allocation4], %s95
          %s97 = smul.u32 8, %s18
          %s99 = ssub.s32 1024, 1024
          %100 = vsyncadd %s93, %s99
          %s101 = smul.addr %s97, 128
          %s102 = scalar_lea.hbm %s1, %s101
          %s103 = sshll.u32 %s96, 4
          %s104 = int_to_ptr.vmem [resolvable:$true] %s103
          %109 = dma.hbm_to_vmem [thread:$0]  %s102, 1024, %s104, %s93, 128, 128, 8
        $region20: #{tpu_custom_call.1} parent=15 // pred_fallthru
          _
      $region16: #{tpu_custom_call.1} parent=5 // pred_fallthru
        _
      %p110 = scmp.le.s32.totalorder 1, %s18
      %p111 = scmp.lt.s32.totalorder %s18, 3
      %p112 = pnand %p110, %p111
      %p113 = pneg %p112
      // Predicated region
      $region21: #{tpu_custom_call.1} parent=5 // pred_check
        _
      $region22: #{tpu_custom_call.1} parent=5 // pred_check_branch
        %115 = sbr.rel (%p112) target = $region24
      $region23: #{tpu_custom_call.1} parent=5 // pred_region
        %s116 = ssub.s32 %s18, 1
        %s117 = sand.u32 %s31, 1
        %s118 = scalar_lea.sflag [#allocation5], %s117
        %s119 = sand.u32 %s31, 1
        %s120 = smul.addr %s119, 64
        %s121 = scalar_lea.vmem [#allocation4], %s120
        // Predicated region
        $region25: #{tpu_custom_call.1} parent=23 // pred_check
          %p122 = pneg %p44
        $region26: #{tpu_custom_call.1} parent=23 // pred_check_branch
          %124 = sbr.rel (%p122) target = $region28
        $region27: #{tpu_custom_call.1} parent=23 // pred_region
          %125 = dma.done %s118, 1024
        $region28: #{tpu_custom_call.1} parent=23 // pred_fallthru
          _
        %s126 = sand.u32 %s31, 1
        %s127 = scalar_lea.sflag [#allocation5], %s126
        %s128 = sand.u32 %s31, 1
        %s129 = smul.addr %s128, 64
        %s130 = scalar_lea.vmem [#allocation4], %s129
        %p131 = pneg %p44
        %p132 = pneg %p41
        %p133 = pneg %p70
        %p134 = pneg %p67
        %s135 = sand.u32 %s57, 1
        %s136 = scalar_lea.sflag [#allocation6], %s135
        %s137 = sand.u32 %s57, 1
        %s138 = smul.addr %s137, 64
        %s139 = scalar_lea.vmem [#allocation7], %s138
        %s140 = smul.u32 8, %s23
        %s141 = smul.u32 8, %s23
        %s142 = sld [smem:[#allocation3]]
        %s143 = sld [smem:[#allocation3 + $0x1]]
        %v144 = vld [vmem:[%s121] sm:$0xff]
        %v145 = vld [vmem:[%s121 + $0x8] sm:$0xff]
        %v146 = vld [vmem:[%s121 + $0x10] sm:$0xff]
        %v147 = vld [vmem:[%s121 + $0x18] sm:$0xff]
        %v148 = vld [vmem:[%s121 + $0x20] sm:$0xff]
        %v149 = vld [vmem:[%s121 + $0x28] sm:$0xff]
        %v150 = vld [vmem:[%s121 + $0x30] sm:$0xff]
        %v151 = vld [vmem:[%s121 + $0x38] sm:$0xff]
        %v152 = vstv %s142
        %v153 = vmul.f32 %v144, %v152
        %v154 = vmul.f32 %v145, %v152
        %v155 = vmul.f32 %v146, %v152
        %v156 = vmul.f32 %v147, %v152
        %v157 = vmul.f32 %v148, %v152
        %v158 = vmul.f32 %v149, %v152
        %v159 = vmul.f32 %v150, %v152
        %v160 = vmul.f32 %v151, %v152
        %v161 = vstv %s143
        %v162 = vadd.f32 %v153, %v161
        %v163 = vadd.f32 %v154, %v161
        %v164 = vadd.f32 %v155, %v161
        %v165 = vadd.f32 %v156, %v161
        %v166 = vadd.f32 %v157, %v161
        %v167 = vadd.f32 %v158, %v161
        %v168 = vadd.f32 %v159, %v161
        %v169 = vadd.f32 %v160, %v161
        %170 = vst [vmem:[%s139] sm:$0xff] %v162
        %171 = vst [vmem:[%s139 + $0x8] sm:$0xff] %v163
        %172 = vst [vmem:[%s139 + $0x10] sm:$0xff] %v164
        %173 = vst [vmem:[%s139 + $0x18] sm:$0xff] %v165
        %174 = vst [vmem:[%s139 + $0x20] sm:$0xff] %v166
        %175 = vst [vmem:[%s139 + $0x28] sm:$0xff] %v167
        %176 = vst [vmem:[%s139 + $0x30] sm:$0xff] %v168
        %177 = vst [vmem:[%s139 + $0x38] sm:$0xff] %v169
        %s178 = sand.u32 %s57, 1
        %s179 = scalar_lea.sflag [#allocation6], %s178
        %s180 = sand.u32 %s57, 1
        %s181 = smul.addr %s180, 64
        %s182 = scalar_lea.vmem [#allocation7], %s181
        // Predicated region
        $region29: #{tpu_custom_call.1} parent=23 // pred_check
          %p183 = pneg %p67
        $region30: #{tpu_custom_call.1} parent=23 // pred_check_branch
          %185 = sbr.rel (%p183) target = $region32
        $region31: #{tpu_custom_call.1} parent=23 // pred_region
          %s186 = smul.u32 8, %s23
          %s188 = ssub.s32 1024, 1024
          %189 = vsyncadd %s179, %s188
          %s190 = smul.addr %s186, 128
          %s191 = scalar_lea.hbm %s2, %s190
          %s192 = sshll.u32 %s182, 4
          %s193 = int_to_ptr.vmem [resolvable:$true] %s192
          %198 = dma.vmem_to_hbm [thread:$0]  %s193, 1024, %s191, %s179, 128, 128, 8
        $region32: #{tpu_custom_call.1} parent=23 // pred_fallthru
          _
      $region24: #{tpu_custom_call.1} parent=5 // pred_fallthru
        _
      %p199 = scmp.le.s32.totalorder 2, %s18
      // Predicated region
      $region33: #{tpu_custom_call.1} parent=5 // pred_check
        %p200 = pneg %p199
      $region34: #{tpu_custom_call.1} parent=5 // pred_check_branch
        %202 = sbr.rel (%p200) target = $region36
      $region35: #{tpu_custom_call.1} parent=5 // pred_region
        %s203 = ssub.s32 %s18, 2
        // Predicated region
        $region37: #{tpu_custom_call.1} parent=35 // pred_check
          %p204 = pneg %p73
        $region38: #{tpu_custom_call.1} parent=35 // pred_check_branch
          %206 = sbr.rel (%p204) target = $region40
        $region39: #{tpu_custom_call.1} parent=35 // pred_region
          %s207 = sand.u32 %s58, 1
          %s208 = scalar_lea.sflag [#allocation6], %s207
          %s209 = sand.u32 %s58, 1
          %s210 = smul.addr %s209, 64
          %s211 = scalar_lea.vmem [#allocation7], %s210
          %212 = dma.done %s208, 1024
        $region40: #{tpu_custom_call.1} parent=35 // pred_fallthru
          _
      $region36: #{tpu_custom_call.1} parent=5 // pred_fallthru
        _
    $region6: #{tpu_custom_call.1} parent=1 // loop_footer
      %s22 = sadd.s32 1, %s18
    $region7: #{tpu_custom_call.1} parent=1 // loop_footer_branch
      %17 = sbr.rel target = $region3
    $region8: #{tpu_custom_call.1} parent=1 // loop_exit
      _
    %213 = vsyncpa [#allocation5], 1
    %s214 = scalar_lea.sflag [#allocation5], 1
    %215 = vsyncpa %s214, 1
    %216 = vsyncpa [#allocation6], 1
    %s217 = scalar_lea.sflag [#allocation6], 1
    %218 = vsyncpa %s217, 1

</llo_original>
